<compile_context>
chip_gen: v5e
topology: v5e:2x2
jax: 0.10.0
libtpu: 0.0.40
codegen_flags: <defaults>
</compile_context>

<pallas_src>
import jax
import jax.numpy as jnp
from jax.experimental import pallas as pl
from jax.experimental.pallas import tpu as pltpu

_LANES = 128
_SUBLANES = 8


def _cdiv(a, b):
    return (a + b - 1) // b


def _round_up(a, b):
    return _cdiv(a, b) * b


def _loss_normed_state_kernel(x_ref, t_ref, s_ref, o_ref, acc_ref):
    """grid = (NC, NT).  Axis 0: per-core split ("parallel").  Axis 1: reduction
    over batch tiles ("arbitrary").  acc_ref is a persistent per-core VMEM
    accumulator of shape (TB, Dr); o_ref is this core's (8, Dr) partial-sum slab."""
    i = pl.program_id(1)

    @pl.when(i == 0)
    def _init():
        acc_ref[...] = jnp.zeros_like(acc_ref)

    x = x_ref[...].astype(jnp.float32)
    t = t_ref[...].astype(jnp.float32)
    s = s_ref[...].astype(jnp.float32)          # (1, Dr) broadcasts over rows
    diff = (x - t) * s                          # pure VPU
    acc_ref[...] += diff * diff                 # no per-tile cross-lane reduce

    @pl.when(i == pl.num_programs(1) - 1)
    def _finalize():
        # Collapse TB rows down to one (8, Dr) slab with sublane-aligned static
        # slices (VPU adds only); the final cross-lane reduce happens outside.
        tb = acc_ref.shape[0]
        partial = acc_ref[0:_SUBLANES, :]
        for r in range(1, tb // _SUBLANES):
            partial = partial + acc_ref[r * _SUBLANES:(r + 1) * _SUBLANES, :]
        o_ref[...] = partial


def loss_normed_state(inputs, targets, scale_to_norm, *,
                      max_tile_rows=512, num_core_splits=2):
    """inputs, targets: [B, D]; scale_to_norm: [1, D] (or [D]).  Returns scalar f32."""
    B, D = inputs.shape
    assert targets.shape == (B, D)
    scale_to_norm = jnp.asarray(scale_to_norm).reshape(1, D)

    # ---- 1) lane-dense repack ------------------------------------------------
    if D % _LANES == 0:
        x2, t2, s2 = inputs, targets, scale_to_norm
        rows, d_r = B, D
    elif _LANES % D == 0:
        rep = _LANES // D
        pad_b = (-B) % rep
        if pad_b:
            inputs = jnp.pad(inputs, ((0, pad_b), (0, 0)))
            targets = jnp.pad(targets, ((0, pad_b), (0, 0)))
        rows = (B + pad_b) * D // _LANES
        d_r = _LANES
        x2 = inputs.reshape(rows, d_r)
        t2 = targets.reshape(rows, d_r)
        s2 = jnp.tile(scale_to_norm, (1, rep))   # scale pattern repeats every D lanes
    else:
        pad_d = (-D) % _LANES
        x2 = jnp.pad(inputs, ((0, 0), (0, pad_d)))
        t2 = jnp.pad(targets, ((0, 0), (0, pad_d)))
        s2 = jnp.pad(scale_to_norm, ((0, 0), (0, pad_d)))
        rows, d_r = B, D + pad_d

    # ---- 2) batch tiling: grid = (NC, NT), tiles of (TB, d_r) ----------------
    itemsize = x2.dtype.itemsize
    # ~2 MiB per pipeline buffer keeps 2 inputs x 2 buffers + acc far below the
    # scoped-VMEM defaults on v5e (16 MiB) / v6e (32 MiB) / v7x (32 of 64 MiB).
    tb_cap = min(max_tile_rows, max(_SUBLANES, (2 * 1024 * 1024) // (d_r * itemsize)))
    tb_cap = max(_SUBLANES, (tb_cap // _SUBLANES) * _SUBLANES)

    nc = num_core_splits
    nt = max(1, _cdiv(rows, nc * tb_cap))
    tb = _round_up(max(1, _cdiv(rows, nc * nt)), _SUBLANES)
    rows_total = nc * nt * tb
    if rows_total != rows:
        x2 = jnp.pad(x2, ((0, rows_total - rows), (0, 0)))
        t2 = jnp.pad(t2, ((0, rows_total - rows), (0, 0)))

    cost = pl.CostEstimate(
        flops=4 * rows_total * d_r,
        transcendentals=0,
        bytes_accessed=(2 * rows_total * d_r + d_r) * itemsize
        + nc * _SUBLANES * d_r * 4,
    )

    partials = pl.pallas_call(
        _loss_normed_state_kernel,
        out_shape=jax.ShapeDtypeStruct((nc * _SUBLANES, d_r), jnp.float32),
        grid_spec=pltpu.PrefetchScalarGridSpec(
            num_scalar_prefetch=0,
            grid=(nc, nt),
            in_specs=[
                pl.BlockSpec((tb, d_r), lambda c, i: (c * nt + i, 0)),
                pl.BlockSpec((tb, d_r), lambda c, i: (c * nt + i, 0)),
                pl.BlockSpec((1, d_r), lambda c, i: (0, 0)),
            ],
            out_specs=pl.BlockSpec((_SUBLANES, d_r), lambda c, i: (c, 0)),
            scratch_shapes=[pltpu.VMEM((tb, d_r), jnp.float32)],
        ),
        compiler_params=pltpu.CompilerParams(
            dimension_semantics=("parallel", "arbitrary"),
            vmem_limit_bytes=32 * 1024 * 1024,
        ),
        cost_estimate=cost,
    )(x2, t2, s2)

    # Tiny final cross-lane reduce + mean over the *true* batch size.
    return jnp.sum(partials) / jnp.float32(B)


def loss_normed_state_ref(inputs, targets, scale_to_norm):
    loss_full = (inputs - targets) * scale_to_norm
    loss_point_wise = jnp.sum(loss_full * loss_full, axis=1, keepdims=True)
    return jnp.mean(loss_point_wise)


def _check(B, D, key, rtol):
    k1, k2, k3 = jax.random.split(key, 3)
    inputs = jax.random.normal(k1, (B, D), dtype=jnp.float32)
    targets = jax.random.normal(k2, (B, D), dtype=jnp.float32)
    scale_to_norm = 0.5 + jax.random.uniform(k3, (1, D), dtype=jnp.float32)

    loss = loss_normed_state(inputs, targets, scale_to_norm)
    loss = jax.block_until_ready(loss)
    ref = loss_normed_state_ref(inputs, targets, scale_to_norm)
    assert jnp.allclose(loss, ref, rtol=rtol, atol=1e-6), (B, D, loss, ref)


if __name__ == "__main__":
    key = jax.random.PRNGKey(0)
    k_a, k_b, k_c = jax.random.split(key, 3)

    # Primary test: shapes implied by the module (batch of state vectors, D=4).
    _check(B=8, D=4, key=k_a, rtol=1e-5)
    # Exercise the multi-tile lane-dense path (grid with >1 reduction step).
    _check(B=40000, D=4, key=k_b, rtol=1e-4)
    # Exercise the native-layout path (D already a multiple of 128).
    _check(B=64, D=256, key=k_c, rtol=1e-4)

    print("KERNEL_OK")
</pallas_src>

<mosaic_0001>
module attributes {stable_mosaic.version = 11 : i64} {
  func.func @_loss_normed_state_kernel(%arg0: i32, %arg1: i32, %arg2: memref<8x128xf32, #tpu.memory_space<vmem>>, %arg3: memref<8x128xf32, #tpu.memory_space<vmem>>, %arg4: memref<1x128xf32, #tpu.memory_space<vmem>>, %arg5: memref<8x128xf32, #tpu.memory_space<vmem>>, %arg6: memref<8x128xf32, #tpu.memory_space<vmem>>) attributes {dimension_semantics = [#tpu.dimension_semantics<parallel>, #tpu.dimension_semantics<arbitrary>], iteration_bounds = array<i64: 2, 1>, scalar_prefetch = 0 : i64, scratch_operands = 1 : i64, tpu.core_type = #tpu.core_type<tc>, window_params = [{transform_indices = @transform_0, window_bounds = array<i64: 8, 128>}, {transform_indices = @transform_1, window_bounds = array<i64: 8, 128>}, {pipeline_mode = #tpu.pipeline_mode<synchronous>, transform_indices = @transform_2, window_bounds = array<i64: 1, 128>}, {transform_indices = @transform_3, window_bounds = array<i64: 8, 128>}]} {
    %c0_i32 = arith.constant 0 : i32
    %0 = arith.cmpi eq, %arg1, %c0_i32 : i32
    %1 = arith.extui %0 : i1 to i32
    %c0_i32_0 = arith.constant 0 : i32
    %2 = arith.cmpi ne, %1, %c0_i32_0 : i32
    scf.if %2 {
      %cst = arith.constant 0.000000e+00 : f32
      %16 = vector.broadcast %cst : f32 to vector<8x128xf32>
      %c0_12 = arith.constant 0 : index
      %c0_13 = arith.constant 0 : index
      %17 = vector.load %arg6[%c0_12, %c0_13] : memref<8x128xf32, #tpu.memory_space<vmem>>, vector<8x128xf32>
      tpu.vector_store %arg6[%c0_12, %c0_13], %16 {strides = array<i32>} : memref<8x128xf32, #tpu.memory_space<vmem>>, vector<8x128xf32>,
    } else {
    }
    %c0 = arith.constant 0 : index
    %c0_1 = arith.constant 0 : index
    %3 = vector.load %arg2[%c0, %c0_1] : memref<8x128xf32, #tpu.memory_space<vmem>>, vector<8x128xf32>
    %c0_2 = arith.constant 0 : index
    %c0_3 = arith.constant 0 : index
    %4 = vector.load %arg3[%c0_2, %c0_3] : memref<8x128xf32, #tpu.memory_space<vmem>>, vector<8x128xf32>
    %c0_4 = arith.constant 0 : index
    %c0_5 = arith.constant 0 : index
    %5 = vector.load %arg4[%c0_4, %c0_5] : memref<1x128xf32, #tpu.memory_space<vmem>>, vector<1x128xf32>
    %6 = arith.subf %3, %4 : vector<8x128xf32>
    %7 = vector.broadcast %5 : vector<1x128xf32> to vector<8x128xf32>
    %8 = arith.mulf %6, %7 : vector<8x128xf32>
    %c0_6 = arith.constant 0 : index
    %c0_7 = arith.constant 0 : index
    %9 = vector.load %arg6[%c0_6, %c0_7] : memref<8x128xf32, #tpu.memory_space<vmem>>, vector<8x128xf32>
    %10 = arith.mulf %8, %8 : vector<8x128xf32>
    %11 = arith.addf %9, %10 : vector<8x128xf32>
    %c0_8 = arith.constant 0 : index
    %c0_9 = arith.constant 0 : index
    %12 = vector.load %arg6[%c0_8, %c0_9] : memref<8x128xf32, #tpu.memory_space<vmem>>, vector<8x128xf32>
    tpu.vector_store %arg6[%c0_8, %c0_9], %11 {strides = array<i32>} : memref<8x128xf32, #tpu.memory_space<vmem>>, vector<8x128xf32>,
    %c0_i32_10 = arith.constant 0 : i32
    %13 = arith.cmpi eq, %arg1, %c0_i32_10 : i32
    %14 = arith.extui %13 : i1 to i32
    %c0_i32_11 = arith.constant 0 : i32
    %15 = arith.cmpi ne, %14, %c0_i32_11 : i32
    scf.if %15 {
      %c0_12 = arith.constant 0 : index
      %c0_13 = arith.constant 0 : index
      %16 = vector.load %arg6[%c0_12, %c0_13] : memref<8x128xf32, #tpu.memory_space<vmem>>, vector<8x128xf32>
      %c0_14 = arith.constant 0 : index
      %c0_15 = arith.constant 0 : index
      %17 = vector.load %arg5[%c0_14, %c0_15] : memref<8x128xf32, #tpu.memory_space<vmem>>, vector<8x128xf32>
      tpu.vector_store %arg5[%c0_14, %c0_15], %16 {strides = array<i32>} : memref<8x128xf32, #tpu.memory_space<vmem>>, vector<8x128xf32>,
    } else {
    }
    return
  }
  func.func @transform_0(%arg0: i32, %arg1: i32) -> (i32, i32) {
    %c1_i32 = arith.constant 1 : i32
    %0 = arith.muli %arg0, %c1_i32 : i32
    %1 = arith.addi %0, %arg1 : i32
    %c0_i32 = arith.constant 0 : i32
    %c0_i32_0 = arith.constant 0 : i32
    return %1, %c0_i32 : i32, i32
  }
  func.func @transform_1(%arg0: i32, %arg1: i32) -> (i32, i32) {
    %c1_i32 = arith.constant 1 : i32
    %0 = arith.muli %arg0, %c1_i32 : i32
    %1 = arith.addi %0, %arg1 : i32
    %c0_i32 = arith.constant 0 : i32
    %c0_i32_0 = arith.constant 0 : i32
    return %1, %c0_i32 : i32, i32
  }
  func.func @transform_2(%arg0: i32, %arg1: i32) -> (i32, i32) {
    %c0_i32 = arith.constant 0 : i32
    %c0_i32_0 = arith.constant 0 : i32
    %c0_i32_1 = arith.constant 0 : i32
    return %c0_i32, %c0_i32_0 : i32, i32
  }
  func.func @transform_3(%arg0: i32, %arg1: i32) -> (i32, i32) {
    %c0_i32 = arith.constant 0 : i32
    %c0_i32_0 = arith.constant 0 : i32
    return %arg0, %c0_i32 : i32, i32
  }
}

</mosaic_0001>

<llo_original>
// kernel: tpu_custom_call.1
$region0: #{tpu_custom_call.1}
  #allocation0 [shape = 'u32[]', space=smem, size = 0x4, offset = 0x4, fixed_abs, tag = 'smem constant byte address 0x4 - core index']
  #allocation1 [shape = 'u32[72,128]{1,0:T(1,128)}', space=vmem, size = 0x9000, scoped, tag = 'internal scratch']
  #allocation2 [shape = 'f32[8,128]{1,0:T(8,128)}', space=vmem, size = 0x1000, scoped, tag = 'scratch operand']
  %s0 = inlined_call_operand.hbm [shape: f32[16,128], index: 0, kind: input, shape index: {}]
  %s1 = inlined_call_operand.hbm [shape: f32[16,128], index: 1, kind: input, shape index: {}]
  %s2 = inlined_call_operand.vmem [shape: f32[1,128], index: 2, kind: input, shape index: {}]
  %s3 = inlined_call_operand.hbm [shape: f32[16,128], index: 3, kind: output, shape index: {}]
  %s4 = sld [smem:[#allocation0]]
  $region61: #{tpu_custom_call.1} parent=0
    _
  %s6 = ssub.s32 1, %s4
  %s7 = scalar_select 0, %s6, %s4
  $region1: #{tpu_custom_call.1} parent=0
    #allocation3 [shape = 'u8[8192]{0}', space=vmem, size = 0x2000, scoped, tag = 'input window, operand 0']
    #allocation4 [shape = 's32[2]{0}', space=sflag, size = 0x8, scoped, tag = 'scoped memory for tpu_custom_call.1']
    #allocation5 [shape = 's32[2]{0}', space=sflag, size = 0x8, scoped, tag = 'scoped memory for tpu_custom_call.1']
    #allocation6 [shape = 'u8[8192]{0}', space=vmem, size = 0x2000, scoped, tag = 'input window, operand 1']
    #allocation7 [shape = 's32[2]{0}', space=sflag, size = 0x8, scoped, tag = 'scoped memory for tpu_custom_call.1']
    #allocation8 [shape = 'u8[8192]{0}', space=vmem, size = 0x2000, scoped, tag = 'output window, operand 0']
    %8 = vsyncpa [#allocation4], 0
    %s9 = scalar_lea.sflag [#allocation4], 1
    %10 = vsyncpa %s9, 0
    %11 = vsyncpa [#allocation7], 0
    %s12 = scalar_lea.sflag [#allocation7], 1
    %13 = vsyncpa %s12, 0
    %14 = vsyncpa [#allocation5], 0
    %s15 = scalar_lea.sflag [#allocation5], 1
    %16 = vsyncpa %s15, 0
    loop: start=0, step=1, limit=4
    $region2: #{tpu_custom_call.1} parent=1 // loop_pre_header
      _
    $region3: #{tpu_custom_call.1} parent=1 // loop_header
      %s18 = sphi 0, %s22
      %p19 = scmp.ge.s32.totalorder %s18, 4
      %s25 = sphi 0, %s37
      %s26 = sphi 0, %s33
      %s27 = sphi 0, %s25
      %s28 = sphi 0, %s26
      %s29 = sphi 0, %s27
      %s30 = sphi 0, %s28
      %s42 = sphi 0, %s44
      %s45 = sphi 0, %s42
      %s46 = sphi 0, %s45
      %s62 = sphi 0, %s46
      %s70 = sphi 0, %s72
      %s73 = sphi 0, %s70
      %s74 = sphi 0, %s73
      %s90 = sphi 0, %s74
      %s94 = sphi 0, %s94
      %s96 = sphi 0, %s94
      %s97 = sphi 0, %s96
      %s111 = sphi 0, %s97
      %s117 = sphi 0, %s119
      %s120 = sphi 0, %s117
      %s121 = sphi 0, %s120
      %s137 = sphi 0, %s121
    $region4: #{tpu_custom_call.1} parent=1 // loop_header_branch
      %21 = sbr.rel (%p19) target = $region8
    $region5: #{tpu_custom_call.1} parent=1 // loop_body
      %s23 = ssub.s32 %s18, 1
      %s24 = ssub.s32 %s18, 2
      %s31 = sadd.s32 1, %s26
      %p32 = scmp.ge.s32.totalorder %s31, 1
      %s33 = scalar_select %p32, 0, %s31
      %s34 = sadd.s32 1, %s25
      %s35 = scalar_select %p32, %s34, %s25
      %p36 = scmp.ge.s32.totalorder %s35, 2
      %s37 = scalar_select %p36, 0, %s35
      %s38 = sadd.s32 %s25, %s26
      %s39 = sadd.s32 %s37, %s33
      %s40 = ssub.s32 %s38, %s39
      %p41 = scmp.eq.s32.totalorder %s40, 0
      %s43 = sadd.s32 %s42, 1
      %s44 = scalar_select %p41, %s42, %s43
      %p47 = pneg %p41
      %p48 = scmp.eq.s32.totalorder %s18, 1
      %p49 = por %p47, %p48
      %p50 = scmp.ne.s32.totalorder %s42, %s45
      %p51 = scmp.eq.s32.totalorder %s18, 0
      %p52 = por %p50, %p51
      %p53 = scmp.ne.s32.totalorder %s42, %s45
      %p54 = scmp.eq.s32.totalorder %s23, 1
      %p55 = por %p53, %p54
      %p56 = scmp.ne.s32.totalorder %s45, %s46
      %p57 = scmp.eq.s32.totalorder %s23, 0
      %p58 = por %p56, %p57
      %p59 = scmp.ne.s32.totalorder %s45, %s46
      %p60 = scmp.eq.s32.totalorder %s24, 1
      %p61 = por %p59, %p60
      %p63 = scmp.ne.s32.totalorder %s46, %s62
      %p64 = scmp.eq.s32.totalorder %s24, 0
      %p65 = por %p63, %p64
      %s66 = sadd.s32 %s25, %s26
      %s67 = sadd.s32 %s37, %s33
      %s68 = ssub.s32 %s66, %s67
      %p69 = scmp.eq.s32.totalorder %s68, 0
      %s71 = sadd.s32 %s70, 1
      %s72 = scalar_select %p69, %s70, %s71
      %p75 = pneg %p69
      %p76 = scmp.eq.s32.totalorder %s18, 1
      %p77 = por %p75, %p76
      %p78 = scmp.ne.s32.totalorder %s70, %s73
      %p79 = scmp.eq.s32.totalorder %s18, 0
      %p80 = por %p78, %p79
      %p81 = scmp.ne.s32.totalorder %s70, %s73
      %p82 = scmp.eq.s32.totalorder %s23, 1
      %p83 = por %p81, %p82
      %p84 = scmp.ne.s32.totalorder %s73, %s74
      %p85 = scmp.eq.s32.totalorder %s23, 0
      %p86 = por %p84, %p85
      %p87 = scmp.ne.s32.totalorder %s73, %s74
      %p88 = scmp.eq.s32.totalorder %s24, 1
      %p89 = por %p87, %p88
      %p91 = scmp.ne.s32.totalorder %s74, %s90
      %p92 = scmp.eq.s32.totalorder %s24, 0
      %p93 = por %p91, %p92
      %s95 = sadd.s32 %s94, 1
      %p98 = scmp.eq.s32.totalorder %s18, 1
      %p99 = scmp.ne.s32.totalorder %s94, %s96
      %p100 = scmp.eq.s32.totalorder %s18, 0
      %p101 = por %p99, %p100
      %p102 = scmp.ne.s32.totalorder %s94, %s96
      %p103 = scmp.eq.s32.totalorder %s23, 1
      %p104 = por %p102, %p103
      %p105 = scmp.ne.s32.totalorder %s96, %s97
      %p106 = scmp.eq.s32.totalorder %s23, 0
      %p107 = por %p105, %p106
      %p108 = scmp.ne.s32.totalorder %s96, %s97
      %p109 = scmp.eq.s32.totalorder %s24, 1
      %p110 = por %p108, %p109
      %p112 = scmp.ne.s32.totalorder %s97, %s111
      %p113 = scmp.eq.s32.totalorder %s24, 0
      %p114 = por %p112, %p113
      %s115 = ssub.s32 %s25, %s37
      %p116 = scmp.eq.s32.totalorder %s115, 0
      %s118 = sadd.s32 %s117, 1
      %s119 = scalar_select %p116, %s117, %s118
      %p122 = pneg %p116
      %p123 = scmp.eq.s32.totalorder %s18, 1
      %p124 = por %p122, %p123
      %p125 = scmp.ne.s32.totalorder %s117, %s120
      %p126 = scmp.eq.s32.totalorder %s18, 0
      %p127 = por %p125, %p126
      %p128 = scmp.ne.s32.totalorder %s117, %s120
      %p129 = scmp.eq.s32.totalorder %s23, 1
      %p130 = por %p128, %p129
      %p131 = scmp.ne.s32.totalorder %s120, %s121
      %p132 = scmp.eq.s32.totalorder %s23, 0
      %p133 = por %p131, %p132
      %p134 = scmp.ne.s32.totalorder %s120, %s121
      %p135 = scmp.eq.s32.totalorder %s24, 1
      %p136 = por %p134, %p135
      %p138 = scmp.ne.s32.totalorder %s121, %s137
      %p139 = scmp.eq.s32.totalorder %s24, 0
      %p140 = por %p138, %p139
      %p141 = scmp.le.s32.totalorder 1, %s18
      %p142 = scmp.lt.s32.totalorder %s18, 3
      %p143 = pnand %p141, %p142
      %p144 = pneg %p143
      // Predicated region
      $region9: #{tpu_custom_call.1} parent=5 // pred_check
        _
      $region10: #{tpu_custom_call.1} parent=5 // pred_check_branch
        %146 = sbr.rel (%p143) target = $region12
      $region11: #{tpu_custom_call.1} parent=5 // pred_region
        %s147 = ssub.s32 %s18, 1
        // Predicated region
        $region13: #{tpu_custom_call.1} parent=11 // pred_check
          %p148 = pneg %p107
        $region14: #{tpu_custom_call.1} parent=11 // pred_check_branch
          %150 = sbr.rel (%p148) target = $region16
        $region15: #{tpu_custom_call.1} parent=11 // pred_region
          _
        $region16: #{tpu_custom_call.1} parent=11 // pred_fallthru
          _
      $region12: #{tpu_custom_call.1} parent=5 // pred_fallthru
        _
      %p151 = scmp.lt.s32.totalorder %s18, 2
      // Predicated region
      $region17: #{tpu_custom_call.1} parent=5 // pred_check
        %p152 = pneg %p151
      $region18: #{tpu_custom_call.1} parent=5 // pred_check_branch
        %154 = sbr.rel (%p152) target = $region20
      $region19: #{tpu_custom_call.1} parent=5 // pred_region
        // Predicated region
        $region21: #{tpu_custom_call.1} parent=19 // pred_check
          %p155 = pneg %p52
        $region22: #{tpu_custom_call.1} parent=19 // pred_check_branch
          %157 = sbr.rel (%p155) target = $region24
        $region23: #{tpu_custom_call.1} parent=19 // pred_region
          %s158 = sand.u32 %s42, 1
          %s159 = scalar_lea.sflag [#allocation4], %s158
          %s160 = sand.u32 %s42, 1
          %s161 = smul.addr %s160, 8
          %s162 = scalar_lea.vmem [#allocation3], %s161
          %s163 = sadd.s32 %s25, %s26
          %165 = vsyncadd %s159, 0
          %s166 = smul.addr %s163, 8
          %s167 = scalar_lea.hbm %s0, %s166
          %s169 = sshll.u32 %s167, 4
          %s170 = int_to_ptr.hbm [resolvable:$true] %s169
          %s171 = sshll.u32 %s162, 4
          %s172 = int_to_ptr.vmem [resolvable:$true] %s171
          %174 = dma.hbm_to_vmem [thread:$0]  %s170, 128, %s172, %s159
        $region24: #{tpu_custom_call.1} parent=19 // pred_fallthru
          _
        // Predicated region
        $region25: #{tpu_custom_call.1} parent=19 // pred_check
          %p175 = pneg %p80
        $region26: #{tpu_custom_call.1} parent=19 // pred_check_branch
          %177 = sbr.rel (%p175) target = $region28
        $region27: #{tpu_custom_call.1} parent=19 // pred_region
          %s178 = sand.u32 %s70, 1
          %s179 = scalar_lea.sflag [#allocation7], %s178
          %s180 = sand.u32 %s70, 1
          %s181 = smul.addr %s180, 8
          %s182 = scalar_lea.vmem [#allocation6], %s181
          %s183 = sadd.s32 %s25, %s26
          %185 = vsyncadd %s179, 0
          %s186 = smul.addr %s183, 8
          %s187 = scalar_lea.hbm %s1, %s186
          %s189 = sshll.u32 %s187, 4
          %s190 = int_to_ptr.hbm [resolvable:$true] %s189
          %s191 = sshll.u32 %s182, 4
          %s192 = int_to_ptr.vmem [resolvable:$true] %s191
          %194 = dma.hbm_to_vmem [thread:$0]  %s190, 128, %s192, %s179
        $region28: #{tpu_custom_call.1} parent=19 // pred_fallthru
          _
      $region20: #{tpu_custom_call.1} parent=5 // pred_fallthru
        _
      %p195 = scmp.le.s32.totalorder 1, %s18
      %p196 = scmp.lt.s32.totalorder %s18, 3
      %p197 = pnand %p195, %p196
      %p198 = pneg %p197
      // Predicated region
      $region29: #{tpu_custom_call.1} parent=5 // pred_check
        _
      $region30: #{tpu_custom_call.1} parent=5 // pred_check_branch
        %200 = sbr.rel (%p197) target = $region32
      $region31: #{tpu_custom_call.1} parent=5 // pred_region
        %s201 = ssub.s32 %s18, 1
        %s202 = sand.u32 %s45, 1
        %s203 = scalar_lea.sflag [#allocation4], %s202
        %s204 = sand.u32 %s45, 1
        %s205 = smul.addr %s204, 8
        %s206 = scalar_lea.vmem [#allocation3], %s205
        // Predicated region
        $region33: #{tpu_custom_call.1} parent=31 // pred_check
          %p207 = pneg %p58
        $region34: #{tpu_custom_call.1} parent=31 // pred_check_branch
          %209 = sbr.rel (%p207) target = $region36
        $region35: #{tpu_custom_call.1} parent=31 // pred_region
          %211 = dma.done %s203, 128
        $region36: #{tpu_custom_call.1} parent=31 // pred_fallthru
          _
        %s212 = sand.u32 %s73, 1
        %s213 = scalar_lea.sflag [#allocation7], %s212
        %s214 = sand.u32 %s73, 1
        %s215 = smul.addr %s214, 8
        %s216 = scalar_lea.vmem [#allocation6], %s215
        // Predicated region
        $region37: #{tpu_custom_call.1} parent=31 // pred_check
          %p217 = pneg %p86
        $region38: #{tpu_custom_call.1} parent=31 // pred_check_branch
          %219 = sbr.rel (%p217) target = $region40
        $region39: #{tpu_custom_call.1} parent=31 // pred_region
          %221 = dma.done %s213, 128
        $region40: #{tpu_custom_call.1} parent=31 // pred_fallthru
          _
        %s222 = sand.u32 %s45, 1
        %s223 = scalar_lea.sflag [#allocation4], %s222
        %s224 = sand.u32 %s45, 1
        %s225 = smul.addr %s224, 8
        %s226 = scalar_lea.vmem [#allocation3], %s225
        %p227 = pneg %p58
        %p228 = pneg %p55
        %s229 = sand.u32 %s73, 1
        %s230 = scalar_lea.sflag [#allocation7], %s229
        %s231 = sand.u32 %s73, 1
        %s232 = smul.addr %s231, 8
        %s233 = scalar_lea.vmem [#allocation6], %s232
        %p234 = pneg %p86
        %p235 = pneg %p83
        %p236 = pneg %p107
        %p237 = pneg %p104
        %p238 = pneg %p133
        %p239 = pneg %p130
        %s240 = sand.u32 %s120, 1
        %s241 = scalar_lea.sflag [#allocation5], %s240
        %s242 = sand.u32 %s120, 1
        %s243 = smul.addr %s242, 8
        %s244 = scalar_lea.vmem [#allocation8], %s243
        %s245 = sadd.s32 %s27, %s28
        %s246 = sadd.s32 %s27, %s28
        %p247 = scmp.eq.s32.totalorder %s28, 0
        // Predicated region
        $region41: #{tpu_custom_call.1} parent=31 // pred_check
          %p248 = pneg %p247
        $region42: #{tpu_custom_call.1} parent=31 // pred_check_branch
          %250 = sbr.rel (%p248) target = $region44
        $region43: #{tpu_custom_call.1} parent=31 // pred_region
          %251 = vst [vmem:[#allocation2] sm:$0xff] 0.0
        $region44: #{tpu_custom_call.1} parent=31 // pred_fallthru
          _
        %v252 = vld [vmem:[%s206] sm:$0xff]
        %v253 = vld [vmem:[%s216] sm:$0xff]
        %v254 = vld [vmem:[%s2] sm:$0x1]
        %v255 = vsub.f32 %v252, %v253
        %v257 = vperm.slane %v254, 0
        %v259 = vmul.f32 %v255, %v257
        %v260 = vld [vmem:[#allocation2] sm:$0xff]
        %v261 = vmul.f32 %v259, %v259
        %v262 = vadd.f32 %v260, %v261
        %263 = vst [vmem:[#allocation2] sm:$0xff] %v262
        // Predicated region
        $region45: #{tpu_custom_call.1} parent=31 // pred_check
          %p264 = pneg %p247
        $region46: #{tpu_custom_call.1} parent=31 // pred_check_branch
          %266 = sbr.rel (%p264) target = $region48
        $region47: #{tpu_custom_call.1} parent=31 // pred_region
          %v267 = vld [vmem:[#allocation2] sm:$0xff]
          %268 = vst [vmem:[%s244] sm:$0xff] %v267
        $region48: #{tpu_custom_call.1} parent=31 // pred_fallthru
          _
        %s269 = sand.u32 %s120, 1
        %s270 = scalar_lea.sflag [#allocation5], %s269
        %s271 = sand.u32 %s120, 1
        %s272 = smul.addr %s271, 8
        %s273 = scalar_lea.vmem [#allocation8], %s272
        // Predicated region
        $region49: #{tpu_custom_call.1} parent=31 // pred_check
          %p274 = pneg %p130
        $region50: #{tpu_custom_call.1} parent=31 // pred_check_branch
          %276 = sbr.rel (%p274) target = $region52
        $region51: #{tpu_custom_call.1} parent=31 // pred_region
          %278 = vsyncadd %s270, 0
          %s279 = smul.addr %s27, 8
          %s280 = scalar_lea.hbm %s3, %s279
          %s282 = sshll.u32 %s273, 4
          %s283 = int_to_ptr.vmem [resolvable:$true] %s282
          %s284 = sshll.u32 %s280, 4
          %s285 = int_to_ptr.hbm [resolvable:$true] %s284
          %287 = dma.vmem_to_hbm [thread:$0]  %s283, 128, %s285, %s270
        $region52: #{tpu_custom_call.1} parent=31 // pred_fallthru
          _
      $region32: #{tpu_custom_call.1} parent=5 // pred_fallthru
        _
      %p288 = scmp.le.s32.totalorder 2, %s18
      // Predicated region
      $region53: #{tpu_custom_call.1} parent=5 // pred_check
        %p289 = pneg %p288
      $region54: #{tpu_custom_call.1} parent=5 // pred_check_branch
        %291 = sbr.rel (%p289) target = $region56
      $region55: #{tpu_custom_call.1} parent=5 // pred_region
        %s292 = ssub.s32 %s18, 2
        // Predicated region
        $region57: #{tpu_custom_call.1} parent=55 // pred_check
          %p293 = pneg %p136
        $region58: #{tpu_custom_call.1} parent=55 // pred_check_branch
          %295 = sbr.rel (%p293) target = $region60
        $region59: #{tpu_custom_call.1} parent=55 // pred_region
          %s296 = sand.u32 %s121, 1
          %s297 = scalar_lea.sflag [#allocation5], %s296
          %s298 = sand.u32 %s121, 1
          %s299 = smul.addr %s298, 8
          %s300 = scalar_lea.vmem [#allocation8], %s299
          %302 = dma.done %s297, 128
        $region60: #{tpu_custom_call.1} parent=55 // pred_fallthru
          _
      $region56: #{tpu_custom_call.1} parent=5 // pred_fallthru
        _
    $region6: #{tpu_custom_call.1} parent=1 // loop_footer
      %s22 = sadd.s32 1, %s18
    $region7: #{tpu_custom_call.1} parent=1 // loop_footer_branch
      %17 = sbr.rel target = $region3
    $region8: #{tpu_custom_call.1} parent=1 // loop_exit
      _
    %303 = vsyncpa [#allocation4], 1
    %s304 = scalar_lea.sflag [#allocation4], 1
    %305 = vsyncpa %s304, 1
    %306 = vsyncpa [#allocation7], 1
    %s307 = scalar_lea.sflag [#allocation7], 1
    %308 = vsyncpa %s307, 1
    %309 = vsyncpa [#allocation5], 1
    %s310 = scalar_lea.sflag [#allocation5], 1
    %311 = vsyncpa %s310, 1

</llo_original>
